<compile_context>
chip_gen: v7x
topology: tpu7x:2x2x1
jax: 0.10.0
libtpu: 0.0.40
codegen_flags: <defaults>
</compile_context>

<pallas_src>
import functools

import jax
import jax.numpy as jnp
from jax.experimental import pallas as pl
from jax.experimental.pallas import tpu as pltpu


def _focal_loss_kernel(logits_ref, targets_ref, alpha_ref, out_ref, *,
                       gamma, n_valid):
    # logits_ref : (C, TILE_N)  native dtype
    # targets_ref: (1, TILE_N)  int32
    # alpha_ref  : (C, 1)       float32
    # out_ref    : (1, 128)     float32 partial-sum block for this tile
    x = logits_ref[...].astype(jnp.float32)              # (C, TILE_N)
    c, tn = x.shape
    t = targets_ref[...]                                  # (1, TILE_N)

    # One-hot class mask along the class (sublane) axis.
    row = jax.lax.broadcasted_iota(jnp.int32, (c, tn), 0)
    class_mask = (row == t).astype(jnp.float32)            # (C, TILE_N)

    # Log-softmax along the class axis (axis=0), numerically stable; the full
    # softmax P is never materialized and there is no (C, N) divide.
    m = jnp.max(x, axis=0, keepdims=True)                  # (1, TILE_N)
    sum_e = jnp.sum(jnp.exp(x - m), axis=0, keepdims=True)  # (1, TILE_N), >= 1
    x_t = jnp.sum(x * class_mask, axis=0, keepdims=True)    # logit of target class
    log_p = x_t - m - jnp.log(sum_e)                        # (1, TILE_N), <= 0
    probs = jnp.exp(log_p)                                  # in (0, 1]

    alpha_t = jnp.sum(alpha_ref[...] * class_mask, axis=0, keepdims=True)

    one_minus = jnp.maximum(1.0 - probs, 0.0)               # clamp fp rounding
    if float(gamma) == float(int(gamma)) and gamma >= 0:
        focal = jnp.ones_like(one_minus)
        for _ in range(int(gamma)):                          # unrolled int power
            focal = focal * one_minus
    else:
        focal = jnp.power(one_minus, jnp.float32(gamma))

    loss = -alpha_t * focal * log_p                          # (1, TILE_N)

    # Mask out padded columns of the last tile.
    start = pl.program_id(0) * tn
    col = jax.lax.broadcasted_iota(jnp.int32, (1, tn), 1) + start
    loss = jnp.where(col < n_valid, loss, 0.0)

    # Per-tile partial sum, written to lane 0 of a lane-dense (1, 128) block.
    total = jnp.sum(loss)
    lane = jax.lax.broadcasted_iota(jnp.int32, (1, 128), 1)
    out_ref[...] = jnp.where(lane == 0, total, 0.0)


def focal_loss(logits, targets, alpha, *, gamma=2.0, size_average=True,
               tile_n=2048):
    """logits: (N, C) float (any float dtype); targets: (N,) int; alpha: (C,)."""
    n, c = logits.shape

    # Lane tile: multiple of 128, no larger than needed for small N.
    tile_n = max(128, min(int(tile_n), -(-n // 128) * 128))
    num_tiles = -(-n // tile_n)
    n_pad = num_tiles * tile_n

    # Lane-dense layout: batch N on the 128-lane axis.
    xt = jnp.transpose(logits)                               # (C, N), native dtype
    tg = targets.astype(jnp.int32)
    if n_pad != n:
        xt = jnp.pad(xt, ((0, 0), (0, n_pad - n)))
        tg = jnp.pad(tg, (0, n_pad - n))
    tg2d = tg.reshape(1, n_pad)
    alpha2d = alpha.astype(jnp.float32).reshape(c, 1)

    kernel = functools.partial(_focal_loss_kernel,
                               gamma=float(gamma),
                               n_valid=int(n))

    partials = pl.pallas_call(
        kernel,
        out_shape=jax.ShapeDtypeStruct((1, num_tiles * 128), jnp.float32),
        grid=(num_tiles,),
        in_specs=[
            pl.BlockSpec((c, tile_n), lambda i: (0, i)),     # logits tile
            pl.BlockSpec((1, tile_n), lambda i: (0, i)),     # targets tile
            pl.BlockSpec((c, 1), lambda i: (0, 0)),          # alpha (resident)
        ],
        out_specs=pl.BlockSpec((1, 128), lambda i: (0, i)),  # per-tile partials
        compiler_params=pltpu.CompilerParams(
            dimension_semantics=("parallel",),
            vmem_limit_bytes=32 * 1024 * 1024),
    )(xt, tg2d, alpha2d)

    total = jnp.sum(partials)                                # tiny final reduce
    if size_average:
        total = total / jnp.float32(n)
    return total


def focal_loss_ref(logits, targets, alpha, *, gamma=2.0, size_average=True):
    """Pure-JAX reference mirroring the PyTorch module."""
    n, c = logits.shape
    p = jax.nn.softmax(logits.astype(jnp.float32), axis=1)
    mask = jax.nn.one_hot(targets, c, dtype=jnp.float32)
    probs = jnp.sum(p * mask, axis=1)
    a = alpha.astype(jnp.float32)[targets]
    batch_loss = -a * jnp.power(1.0 - probs, gamma) * jnp.log(probs)
    return jnp.mean(batch_loss) if size_average else jnp.sum(batch_loss)


if __name__ == "__main__":
    # Module implies binary classification: alpha = Tensor([1, 1]) -> C = 2,
    # gamma = 2, size_average = True.  Small deterministic inputs:
    N, C = 8, 2
    key = jax.random.PRNGKey(0)
    k_logits, k_targets = jax.random.split(key)

    logits = jax.random.normal(k_logits, (N, C), dtype=jnp.float32)
    targets = jax.random.randint(k_targets, (N,), 0, C, dtype=jnp.int32)
    alpha = jnp.array([1.0, 1.0], dtype=jnp.float32)   # self.alpha = Tensor([1, 1])

    loss = focal_loss(logits, targets, alpha, gamma=2.0, size_average=True)
    jax.block_until_ready(loss)

    ref = focal_loss_ref(logits, targets, alpha, gamma=2.0, size_average=True)
    assert jnp.allclose(loss, ref, rtol=1e-5, atol=1e-6), (loss, ref)

    print("KERNEL_OK")
</pallas_src>

<mosaic_0001>
module attributes {stable_mosaic.version = 11 : i64} {
  func.func @_focal_loss_kernel(%arg0: i32, %arg1: memref<2x128xf32, #tpu.memory_space<vmem>>, %arg2: memref<1x128xi32, #tpu.memory_space<vmem>>, %arg3: memref<2x1xf32, #tpu.memory_space<vmem>>, %arg4: memref<1x128xf32, #tpu.memory_space<vmem>>) attributes {dimension_semantics = [#tpu.dimension_semantics<parallel>], iteration_bounds = array<i64: 1>, scalar_prefetch = 0 : i64, scratch_operands = 0 : i64, tpu.core_type = #tpu.core_type<tc>, window_params = [{transform_indices = @transform_0, window_bounds = array<i64: 2, 128>}, {transform_indices = @transform_1, window_bounds = array<i64: 1, 128>}, {pipeline_mode = #tpu.pipeline_mode<synchronous>, transform_indices = @transform_2, window_bounds = array<i64: 2, 1>}, {transform_indices = @transform_3, window_bounds = array<i64: 1, 128>}]} {
    %c0 = arith.constant 0 : index
    %c0_0 = arith.constant 0 : index
    %0 = vector.load %arg1[%c0, %c0_0] : memref<2x128xf32, #tpu.memory_space<vmem>>, vector<2x128xf32>
    %c0_1 = arith.constant 0 : index
    %c0_2 = arith.constant 0 : index
    %1 = vector.load %arg2[%c0_1, %c0_2] : memref<1x128xi32, #tpu.memory_space<vmem>>, vector<1x128xi32>
    %2 = tpu.iota {dimensions = array<i32: 0>} : vector<2x128xi32>
    %3 = vector.broadcast %1 : vector<1x128xi32> to vector<2x128xi32>
    %4 = arith.cmpi eq, %2, %3 : vector<2x128xi32>
    %5 = arith.extui %4 : vector<2x128xi1> to vector<2x128xi32>
    %6 = arith.sitofp %5 : vector<2x128xi32> to vector<2x128xf32>
    %cst = arith.constant dense<0xFF800000> : vector<128xf32>
    %7 = vector.multi_reduction <maximumf>, %0, %cst [0] : vector<2x128xf32> to vector<128xf32>
    %8 = vector.shape_cast %7 : vector<128xf32> to vector<1x128xf32>
    %9 = vector.broadcast %8 : vector<1x128xf32> to vector<2x128xf32>
    %10 = arith.subf %0, %9 : vector<2x128xf32>
    %11 = math.exp %10 : vector<2x128xf32>
    %cst_3 = arith.constant dense<0.000000e+00> : vector<128xf32>
    %12 = vector.multi_reduction <add>, %11, %cst_3 [0] : vector<2x128xf32> to vector<128xf32>
    %13 = vector.shape_cast %12 : vector<128xf32> to vector<1x128xf32>
    %14 = arith.mulf %0, %6 : vector<2x128xf32>
    %cst_4 = arith.constant dense<0.000000e+00> : vector<128xf32>
    %15 = vector.multi_reduction <add>, %14, %cst_4 [0] : vector<2x128xf32> to vector<128xf32>
    %16 = vector.shape_cast %15 : vector<128xf32> to vector<1x128xf32>
    %17 = arith.subf %16, %8 : vector<1x128xf32>
    %18 = math.log %13 : vector<1x128xf32>
    %19 = arith.subf %17, %18 : vector<1x128xf32>
    %20 = math.exp %19 : vector<1x128xf32>
    %c0_5 = arith.constant 0 : index
    %c0_6 = arith.constant 0 : index
    %21 = vector.load %arg3[%c0_5, %c0_6] : memref<2x1xf32, #tpu.memory_space<vmem>>, vector<2x1xf32>
    %22 = vector.broadcast %21 : vector<2x1xf32> to vector<2x128xf32>
    %23 = arith.mulf %22, %6 : vector<2x128xf32>
    %cst_7 = arith.constant dense<0.000000e+00> : vector<128xf32>
    %24 = vector.multi_reduction <add>, %23, %cst_7 [0] : vector<2x128xf32> to vector<128xf32>
    %25 = vector.shape_cast %24 : vector<128xf32> to vector<1x128xf32>
    %cst_8 = arith.constant 1.000000e+00 : f32
    %26 = vector.broadcast %cst_8 : f32 to vector<1x128xf32>
    %27 = arith.subf %26, %20 : vector<1x128xf32>
    %cst_9 = arith.constant 0.000000e+00 : f32
    %28 = vector.broadcast %cst_9 : f32 to vector<1x128xf32>
    %29 = arith.maximumf %27, %28 : vector<1x128xf32>
    %cst_10 = arith.constant 1.000000e+00 : f32
    %30 = vector.broadcast %cst_10 : f32 to vector<1x128xf32>
    %31 = arith.mulf %30, %29 : vector<1x128xf32>
    %32 = arith.mulf %31, %29 : vector<1x128xf32>
    %cst_11 = arith.constant 0.000000e+00 : f32
    %33 = vector.broadcast %cst_11 : f32 to vector<1x128xf32>
    %34 = arith.subf %33, %25 : vector<1x128xf32>
    %35 = arith.mulf %34, %32 : vector<1x128xf32>
    %36 = arith.mulf %35, %19 : vector<1x128xf32>
    %c128_i32 = arith.constant 128 : i32
    %37 = arith.muli %arg0, %c128_i32 : i32
    %38 = tpu.iota {dimensions = array<i32: 1>} : vector<1x128xi32>
    %39 = vector.broadcast %37 : i32 to vector<1x128xi32>
    %40 = arith.addi %38, %39 : vector<1x128xi32>
    %c8_i32 = arith.constant 8 : i32
    %41 = vector.broadcast %c8_i32 : i32 to vector<1x128xi32>
    %42 = arith.cmpi slt, %40, %41 : vector<1x128xi32>
    %cst_12 = arith.constant 0.000000e+00 : f32
    %43 = vector.broadcast %cst_12 : f32 to vector<1x128xf32>
    %44 = arith.select %42, %36, %43 : vector<1x128xi1>, vector<1x128xf32>
    %45 = vector.shape_cast %44 : vector<1x128xf32> to vector<1x1x128xf32>
    %cst_13 = arith.constant dense<0.000000e+00> : vector<1xf32>
    %46 = vector.multi_reduction <add>, %45, %cst_13 [1, 2] : vector<1x1x128xf32> to vector<1xf32>
    %47 = vector.shape_cast %46 : vector<1xf32> to vector<1x1x1xf32>
    %48 = vector.extract %47[0, 0, 0] : f32 from vector<1x1x1xf32>
    %49 = tpu.iota {dimensions = array<i32: 1>} : vector<1x128xi32>
    %c0_i32 = arith.constant 0 : i32
    %50 = vector.broadcast %c0_i32 : i32 to vector<1x128xi32>
    %51 = arith.cmpi eq, %49, %50 : vector<1x128xi32>
    %cst_14 = arith.constant 0.000000e+00 : f32
    %52 = vector.broadcast %48 : f32 to vector<1x128xf32>
    %53 = vector.broadcast %cst_14 : f32 to vector<1x128xf32>
    %54 = arith.select %51, %52, %53 : vector<1x128xi1>, vector<1x128xf32>
    %c0_15 = arith.constant 0 : index
    %c0_16 = arith.constant 0 : index
    %55 = vector.load %arg4[%c0_15, %c0_16] : memref<1x128xf32, #tpu.memory_space<vmem>>, vector<1x128xf32>
    tpu.vector_store %arg4[%c0_15, %c0_16], %54 {strides = array<i32>} : memref<1x128xf32, #tpu.memory_space<vmem>>, vector<1x128xf32>,
    return
  }
  func.func @transform_0(%arg0: i32) -> (i32, i32) {
    %c0_i32 = arith.constant 0 : i32
    %c0_i32_0 = arith.constant 0 : i32
    return %c0_i32, %arg0 : i32, i32
  }
  func.func @transform_1(%arg0: i32) -> (i32, i32) {
    %c0_i32 = arith.constant 0 : i32
    %c0_i32_0 = arith.constant 0 : i32
    return %c0_i32, %arg0 : i32, i32
  }
  func.func @transform_2(%arg0: i32) -> (i32, i32) {
    %c0_i32 = arith.constant 0 : i32
    %c0_i32_0 = arith.constant 0 : i32
    %c0_i32_1 = arith.constant 0 : i32
    return %c0_i32, %c0_i32_0 : i32, i32
  }
  func.func @transform_3(%arg0: i32) -> (i32, i32) {
    %c0_i32 = arith.constant 0 : i32
    %c0_i32_0 = arith.constant 0 : i32
    return %c0_i32, %arg0 : i32, i32
  }
}

</mosaic_0001>

<llo_original>
// kernel: tpu_custom_call.1
$region0: #{tpu_custom_call.1}
  #allocation0 [shape = 'u32[]', space=smem, size = 0x4, offset = 0x4, fixed_abs, tag = 'smem constant byte address 0x4 - core index']
  #allocation1 [shape = 'u32[144,128]{1,0:T(1,128)}', space=vmem, size = 0x12000, scoped, tag = 'internal scratch']
  %s0 = inlined_call_operand.vmem [shape: f32[2,128], index: 0, kind: input, shape index: {}]
  %s1 = inlined_call_operand.vmem [shape: s32[1,128], index: 1, kind: input, shape index: {}]
  %s2 = inlined_call_operand.vmem [shape: f32[2,1], index: 2, kind: input, shape index: {}]
  %s3 = inlined_call_operand.hbm [shape: f32[1,128], index: 3, kind: output, shape index: {}]
  %s4 = sld [smem:[#allocation0]]
  $region22: #{tpu_custom_call.1} parent=0
    _
  %s6 = ssub.s32 1, %s4
  %s7 = scalar_select 0, %s6, %s4
  $region1: #{tpu_custom_call.1} parent=0
    #allocation2 [shape = 'u8[512]{0}', space=vmem, size = 0x400, scoped, tag = 'output window, operand 0, single buffered']
    #allocation3 [shape = 's32[1]{0}', space=sflag, size = 0x4, scoped, tag = 'scoped memory for tpu_custom_call.1']
    %8 = vsyncpa [#allocation3], 0
    // Predicated region
    $region2: #{tpu_custom_call.1} parent=1 // pred_check
      _
    $region3: #{tpu_custom_call.1} parent=1 // pred_check_branch
      %10 = sbr.rel (0) target = $region5
    $region4: #{tpu_custom_call.1} parent=1 // pred_region
      _
    $region5: #{tpu_custom_call.1} parent=1 // pred_fallthru
      _
    // Predicated region
    $region6: #{tpu_custom_call.1} parent=1 // pred_check
      _
    $region7: #{tpu_custom_call.1} parent=1 // pred_check_branch
      %12 = sbr.rel (0) target = $region9
    $region8: #{tpu_custom_call.1} parent=1 // pred_region
      _
    $region9: #{tpu_custom_call.1} parent=1 // pred_fallthru
      _
    // Predicated region
    $region10: #{tpu_custom_call.1} parent=1 // pred_check
      _
    $region11: #{tpu_custom_call.1} parent=1 // pred_check_branch
      %14 = sbr.rel (0) target = $region13
    $region12: #{tpu_custom_call.1} parent=1 // pred_region
      _
    $region13: #{tpu_custom_call.1} parent=1 // pred_fallthru
      _
    %v15 = vld [vmem:[%s0] sm:$0x3]
    %v16 = vld [vmem:[%s1] sm:$0x1]
    %v17 = vlaneseq
    %v18 = vshrl.u32 %v17, 7
    %v19 = vlaneseq
    %v20 = vshrl.u32 %v19, 7
    %v21 = vsub.s32 0, %v20
    %v22 = vrot.slane %v16, %v21
    %vm23 = vcmp.eq.s32.totalorder %v18, %v22
    %v24 = vsel %vm23, 1, 0
    %v25 = vcvt.s32.f32 %v24
    %vm26 = vcmask 1041408
    %v27 = vsel %vm26, %v15, -inf
    %v28 = vrot.slane %v27, 4
    %v29 = vmax.f32 %v27, %v28
    %v30 = vrot.slane %v29, 2
    %v31 = vmax.f32 %v29, %v30
    %v32 = vrot.slane %v31, 1
    %v33 = vmax.f32 %v31, %v32
    %v34 = vsub.f32 %v15, %v33
    %v35 = vmul.f32 %v34, 1.442695
    %v36 = vpow.pop %v35
    %v37 = vsel %vm26, %v36, 0.0
    %v38 = vrot.slane %v37, 4
    %v39 = vadd.f32 %v37, %v38
    %v40 = vrot.slane %v39, 2
    %v41 = vadd.f32 %v39, %v40
    %v42 = vrot.slane %v41, 1
    %v43 = vadd.f32 %v41, %v42
    %v44 = vmul.f32 %v15, %v25
    %v45 = vsel %vm26, %v44, 0.0
    %v46 = vrot.slane %v45, 4
    %v47 = vadd.f32 %v45, %v46
    %v48 = vrot.slane %v47, 2
    %v49 = vadd.f32 %v47, %v48
    %v50 = vrot.slane %v49, 1
    %v51 = vadd.f32 %v49, %v50
    %v52 = vsub.f32 %v51, %v33
    %v53 = vlog2.pop %v43
    %v54 = vmul.f32 %v53, 0.6931472
    %v55 = vsub.f32 %v52, %v54
    %v56 = vmul.f32 %v55, 1.442695
    %v57 = vpow.pop %v56
    %v58 = vld [vmem:[%s2] sm:$0x3]
    %60 = vset.pattern.permute.xlu0 0
    %61 = vperm.xlu0 %60, %v58
    %v62 = vpop.permute.xlu0 %61
    %v64 = vmul.f32 %v62, %v25
    %v65 = vsel %vm26, %v64, 0.0
    %v66 = vrot.slane %v65, 4
    %v67 = vadd.f32 %v65, %v66
    %v68 = vrot.slane %v67, 2
    %v69 = vadd.f32 %v67, %v68
    %v70 = vrot.slane %v69, 1
    %v71 = vadd.f32 %v69, %v70
    %v72 = vsub.f32 1.0, %v57
    %v73 = vmax.f32 %v72, 0.0
    %v74 = vmul.f32 %v73, %v73
    %v75 = vsub.f32 0.0, %v71
    %v76 = vmul.f32 %v75, %v74
    %v77 = vmul.f32 %v76, %v55
    %s78 = smul.u32 0, 128
    %v79 = vlaneseq
    %v80 = vand.u32 %v79, 127
    %v81 = vstv %s78
    %v82 = vadd.s32 %v80, %v81
    %vm83 = vcmp.lt.s32.totalorder %v82, 8
    %v84 = vsel %vm83, %v77, 0.0
    %vm85 = vcmask 1040384
    %v86 = vsel %vm85, %v84, 0.0
    %87 = vadd.xlane.f32.xlu0 %v86
    %v88 = vpop.xlane.xlu0 %87
    %v89 = vrot.slane %v88, 4
    %v90 = vadd.f32 %v88, %v89
    %v91 = vrot.slane %v90, 2
    %v92 = vadd.f32 %v90, %v91
    %v93 = vrot.slane %v92, 1
    %v94 = vadd.f32 %v92, %v93
    %s95 = vtos %v94
    %vm96 = vcmp.eq.s32.totalorder %v80, 0
    %v97 = vstv %s95
    %v98 = vsel %vm96, %v97, 0.0
    %99 = vst [vmem:[#allocation2] sm:$0x1] %v98
    // Predicated region
    $region14: #{tpu_custom_call.1} parent=1 // pred_check
      _
    $region15: #{tpu_custom_call.1} parent=1 // pred_check_branch
      %101 = sbr.rel (0) target = $region17
    $region16: #{tpu_custom_call.1} parent=1 // pred_region
      %s103 = ssub.s32 16, 16
      %104 = vsyncadd [#allocation3], %s103
      %s106 = sshll.u32 [#allocation2], 4
      %s107 = int_to_ptr.vmem [resolvable:$true] %s106
      %109 = dma.vmem_to_hbm [thread:$0]  %s107, 16, %s3, [#allocation3]
    $region17: #{tpu_custom_call.1} parent=1 // pred_fallthru
      _
    // Predicated region
    $region18: #{tpu_custom_call.1} parent=1 // pred_check
      _
    $region19: #{tpu_custom_call.1} parent=1 // pred_check_branch
      %111 = sbr.rel (0) target = $region21
    $region20: #{tpu_custom_call.1} parent=1 // pred_region
      %112 = dma.done [#allocation3], 16
    $region21: #{tpu_custom_call.1} parent=1 // pred_fallthru
      _
    %113 = vsyncpa [#allocation3], 1

</llo_original>
